<compile_context>
chip_gen: v5e
topology: v5e:2x2
jax: 0.10.0
libtpu: 0.0.40
codegen_flags: <defaults>
</compile_context>

<pallas_src>
import functools

import jax
import jax.numpy as jnp
from jax import lax
from jax.experimental import pallas as pl
from jax.experimental.pallas import tpu as pltpu


def _round_up(v, m):
    return ((v + m - 1) // m) * m


def _lora_kernel(x_ref, a_ref, bt_ref, o_ref, acc_ref, *, scaling):
    """One (M-tile, K-tile) grid step.

    x_ref:  (bm, bk)         activation tile
    a_ref:  (rank, bk)       LoRA A tile (K-sliced)
    bt_ref: (rank, out_dim)  LoRA B pre-transposed (grid-invariant, VMEM-resident)
    o_ref:  (bm, out_dim)    output tile (resident across the K axis)
    acc_ref:(bm, rank) f32   accumulator for x @ A.T
    """
    k = pl.program_id(1)

    @pl.when(k == 0)
    def _():
        acc_ref[...] = jnp.zeros_like(acc_ref)

    # x @ A.T over this K slice: contract the last dims of x and A (no transpose).
    acc_ref[...] += lax.dot_general(
        x_ref[...], a_ref[...],
        dimension_numbers=(((1,), (1,)), ((), ())),
        preferred_element_type=jnp.float32,
    )

    @pl.when(k == pl.num_programs(1) - 1)
    def _():
        # Scale the small (bm, rank) intermediate instead of the big output.
        xa = (acc_ref[...] * scaling).astype(bt_ref.dtype)
        out = lax.dot_general(
            xa, bt_ref[...],
            dimension_numbers=(((1,), (0,)), ((), ())),
            preferred_element_type=jnp.float32,
        )
        o_ref[...] = out.astype(o_ref.dtype)


def lora_forward(x, A, B, alpha, *, bm_max=4096, bk_max=None,
                 vmem_budget_bytes=None):
    """LoRA forward: x @ A.T @ B.T * (alpha / rank).

    x: [..., in_dim], A: [rank, in_dim], B: [out_dim, rank]
    """
    rank, in_dim = A.shape
    out_dim, rank_b = B.shape
    assert rank_b == rank, (A.shape, B.shape)
    assert x.shape[-1] == in_dim, (x.shape, A.shape)
    scaling = float(alpha) / float(rank)

    leading = x.shape[:-1]
    M = 1
    for d in leading:
        M *= int(d)
    x2d = x.reshape(M, in_dim)
    # One-time tiny transpose so rank sits on the sublane axis of both weights
    # and out_dim is lane-dense in the second matmul / output store.
    Bt = B.T  # [rank, out_dim]

    itemsize = jnp.dtype(x.dtype).itemsize
    sublane = max(8, 32 // itemsize)  # 8 f32 / 16 bf16 / 32 int8

    # Generation-aware VMEM plan (≈48 MiB on v7x, ≈96 MiB on v5e/v6e).
    cap = None
    if vmem_budget_bytes is None:
        try:
            cap = int(getattr(pltpu.get_tpu_info(), "vmem_capacity_bytes",
                              64 * 1024 * 1024))
        except Exception:
            cap = 64 * 1024 * 1024
        vmem_budget_bytes = (3 * cap) // 4

    def vmem_bytes(bm, bk):
        return (2 * bm * bk * itemsize            # x tile (double-buffered)
                + 2 * bm * out_dim * itemsize     # out tile (double-buffered)
                + 2 * rank * bk * itemsize        # A tile
                + 2 * rank * out_dim * itemsize   # B.T (grid-invariant)
                + bm * rank * 4)                  # f32 accumulator scratch
    # TODO(synk): mark the A / Bt BlockSpecs pipeline_mode=pl.Buffered(1)
    # (grid-invariant blocks never re-DMA) and drop their 2x factor above once
    # single-buffered inputs are universally supported.

    bm_max = max(sublane, (int(bm_max) // sublane) * sublane)
    bm = min(bm_max, _round_up(M, sublane))
    # Keep >= 2 row tiles when there is enough data so the "parallel" M axis
    # can split across v7x's two TensorCores.
    if M > sublane:
        bm = min(bm, _round_up((M + 1) // 2, sublane))
    bm = max(sublane, bm)

    bk = in_dim
    if bk_max is not None:
        while bk > bk_max and bk % 256 == 0:
            bk //= 2

    # Fit the plan into the budget: keep bm >= 512 rows while possible, then
    # split K (bk stays a 128-multiple divisor of in_dim), then shrink bm.
    while vmem_bytes(bm, bk) > vmem_budget_bytes:
        if bm > 512:
            bm = max(512, _round_up(bm // 2, sublane))
        elif bk % 256 == 0 and bk >= 512:
            bk //= 2
        elif bm > sublane:
            bm = max(sublane, _round_up(bm // 2, sublane))
        else:
            break

    grid_m = pl.cdiv(M, bm)
    assert in_dim % bk == 0, (in_dim, bk)
    grid_k = in_dim // bk

    flops = 2 * M * in_dim * rank + 2 * M * rank * out_dim
    bytes_accessed = (x2d.size + A.size + Bt.size + M * out_dim) * itemsize
    cost = pl.CostEstimate(flops=flops, transcendentals=0,
                           bytes_accessed=bytes_accessed)

    vmem_limit = max(vmem_bytes(bm, bk) + 8 * 1024 * 1024, 16 * 1024 * 1024)
    if cap is not None:
        vmem_limit = min(vmem_limit, cap)

    # TODO(synk): dropout > 0 path (stateful PRNG mask via pltpu.prng_*) not
    # implemented; the module default dropout=0.0 is an Identity, reproduced here.
    # TODO(synk): optionally cast A/Bt (and x at the caller) to bf16 on v5e/v6e
    # for another ~2x HBM-bytes reduction; kept in the input dtype for exactness.
    kernel = functools.partial(_lora_kernel, scaling=scaling)
    out2d = pl.pallas_call(
        kernel,
        out_shape=jax.ShapeDtypeStruct((M, out_dim), x.dtype),
        grid_spec=pltpu.PrefetchScalarGridSpec(
            num_scalar_prefetch=0,
            grid=(grid_m, grid_k),
            in_specs=[
                pl.BlockSpec((bm, bk), lambda i, k: (i, k)),
                pl.BlockSpec((rank, bk), lambda i, k: (0, k)),
                pl.BlockSpec((rank, out_dim), lambda i, k: (0, 0)),
            ],
            out_specs=pl.BlockSpec((bm, out_dim), lambda i, k: (i, 0)),
            scratch_shapes=[pltpu.VMEM((bm, rank), jnp.float32)],
        ),
        compiler_params=pltpu.CompilerParams(
            dimension_semantics=("parallel", "arbitrary"),
            vmem_limit_bytes=int(vmem_limit),
        ),
        cost_estimate=cost,
    )(x2d, A, Bt)

    return out2d.reshape(*leading, out_dim)


def lora_reference(x, A, B, alpha):
    scaling = float(alpha) / float(A.shape[0])
    xa = jnp.einsum("...k,rk->...r", x, A, precision=lax.Precision.HIGHEST)
    return jnp.einsum("...r,or->...o", xa, B,
                      precision=lax.Precision.HIGHEST) * scaling


def trunc_normal(key, shape, std=0.02, dtype=jnp.float32):
    # Matches timm's trunc_normal_ closely enough for synthetic init:
    # truncated normal on [-2, 2] scaled by std.
    return jax.random.truncated_normal(key, -2.0, 2.0, shape, dtype) * std


if __name__ == "__main__":
    key = jax.random.PRNGKey(0)
    kx, ka, kb = jax.random.split(key, 3)

    # Case 1: module-default shapes (batch=2, seq=8, in_dim=out_dim=32,
    # rank=64, alpha=128 -> scaling=2.0).
    batch, seq, in_dim, out_dim, rank, alpha = 2, 8, 32, 32, 64, 128
    x = jax.random.normal(kx, (batch, seq, in_dim), dtype=jnp.float32)
    A = trunc_normal(ka, (rank, in_dim))
    B = trunc_normal(kb, (out_dim, rank))

    out = jax.block_until_ready(lora_forward(x, A, B, alpha))
    ref = lora_reference(x, A, B, alpha)
    assert out.shape == (batch, seq, out_dim), out.shape
    assert jnp.allclose(out, ref, atol=1e-3, rtol=1e-3), float(
        jnp.max(jnp.abs(out - ref)))

    # Case 2: small shapes that exercise the K-split accumulator and the
    # ragged-M partial output block.
    M2, in2, out2, rank2, alpha2 = 40, 512, 128, 8, 16
    x2 = jax.random.normal(kb, (M2, in2), dtype=jnp.float32)
    A2 = trunc_normal(kx, (rank2, in2))
    B2 = trunc_normal(ka, (out2, rank2))

    y2 = jax.block_until_ready(
        lora_forward(x2, A2, B2, alpha2, bm_max=32, bk_max=256))
    ref2 = lora_reference(x2, A2, B2, alpha2)
    assert y2.shape == (M2, out2), y2.shape
    assert jnp.allclose(y2, ref2, atol=1e-3, rtol=1e-3), float(
        jnp.max(jnp.abs(y2 - ref2)))

    print("KERNEL_OK")
</pallas_src>

<mosaic_0001>
module attributes {stable_mosaic.version = 11 : i64} {
  func.func @_lora_kernel(%arg0: i32, %arg1: i32, %arg2: memref<8x32xf32, #tpu.memory_space<vmem>>, %arg3: memref<64x32xf32, #tpu.memory_space<vmem>>, %arg4: memref<64x32xf32, #tpu.memory_space<vmem>>, %arg5: memref<8x32xf32, #tpu.memory_space<vmem>>, %arg6: memref<8x64xf32, #tpu.memory_space<vmem>>) attributes {dimension_semantics = [#tpu.dimension_semantics<parallel>, #tpu.dimension_semantics<arbitrary>], iteration_bounds = array<i64: 2, 1>, scalar_prefetch = 0 : i64, scratch_operands = 1 : i64, tpu.core_type = #tpu.core_type<tc>, window_params = [{transform_indices = @transform_0, window_bounds = array<i64: 8, 32>}, {transform_indices = @transform_1, window_bounds = array<i64: 64, 32>}, {pipeline_mode = #tpu.pipeline_mode<synchronous>, transform_indices = @transform_2, window_bounds = array<i64: 64, 32>}, {transform_indices = @transform_3, window_bounds = array<i64: 8, 32>}]} {
    %c0_i32 = arith.constant 0 : i32
    %0 = arith.cmpi eq, %arg1, %c0_i32 : i32
    %1 = arith.extui %0 : i1 to i32
    %c0_i32_0 = arith.constant 0 : i32
    %2 = arith.cmpi ne, %1, %c0_i32_0 : i32
    scf.if %2 {
      %cst_10 = arith.constant 0.000000e+00 : f32
      %12 = vector.broadcast %cst_10 : f32 to vector<8x64xf32>
      %c0_11 = arith.constant 0 : index
      %c0_12 = arith.constant 0 : index
      %13 = vector.load %arg6[%c0_11, %c0_12] : memref<8x64xf32, #tpu.memory_space<vmem>>, vector<8x64xf32>
      tpu.vector_store %arg6[%c0_11, %c0_12], %12 {strides = array<i32>} : memref<8x64xf32, #tpu.memory_space<vmem>>, vector<8x64xf32>,
    } else {
    }
    %c0 = arith.constant 0 : index
    %c0_1 = arith.constant 0 : index
    %3 = vector.load %arg6[%c0, %c0_1] : memref<8x64xf32, #tpu.memory_space<vmem>>, vector<8x64xf32>
    %c0_2 = arith.constant 0 : index
    %c0_3 = arith.constant 0 : index
    %4 = vector.load %arg2[%c0_2, %c0_3] : memref<8x32xf32, #tpu.memory_space<vmem>>, vector<8x32xf32>
    %c0_4 = arith.constant 0 : index
    %c0_5 = arith.constant 0 : index
    %5 = vector.load %arg3[%c0_4, %c0_5] : memref<64x32xf32, #tpu.memory_space<vmem>>, vector<64x32xf32>
    %cst = arith.constant dense<0.000000e+00> : vector<8x64xf32>
    %6 = tpu.matmul %4, %5, %cst {dimension_numbers = #tpu.dot_dimension_numbers<[1], [1], [0], [0], [0, 0, 1, 0], [], []>} : vector<8x32xf32>, vector<64x32xf32>, vector<8x64xf32> -> vector<8x64xf32>
    %7 = arith.addf %3, %6 : vector<8x64xf32>
    %c0_6 = arith.constant 0 : index
    %c0_7 = arith.constant 0 : index
    %8 = vector.load %arg6[%c0_6, %c0_7] : memref<8x64xf32, #tpu.memory_space<vmem>>, vector<8x64xf32>
    tpu.vector_store %arg6[%c0_6, %c0_7], %7 {strides = array<i32>} : memref<8x64xf32, #tpu.memory_space<vmem>>, vector<8x64xf32>,
    %c0_i32_8 = arith.constant 0 : i32
    %9 = arith.cmpi eq, %arg1, %c0_i32_8 : i32
    %10 = arith.extui %9 : i1 to i32
    %c0_i32_9 = arith.constant 0 : i32
    %11 = arith.cmpi ne, %10, %c0_i32_9 : i32
    scf.if %11 {
      %c0_10 = arith.constant 0 : index
      %c0_11 = arith.constant 0 : index
      %12 = vector.load %arg6[%c0_10, %c0_11] : memref<8x64xf32, #tpu.memory_space<vmem>>, vector<8x64xf32>
      %cst_12 = arith.constant 2.000000e+00 : f32
      %13 = vector.broadcast %cst_12 : f32 to vector<8x64xf32>
      %14 = arith.mulf %12, %13 : vector<8x64xf32>
      %c0_13 = arith.constant 0 : index
      %c0_14 = arith.constant 0 : index
      %15 = vector.load %arg4[%c0_13, %c0_14] : memref<64x32xf32, #tpu.memory_space<vmem>>, vector<64x32xf32>
      %cst_15 = arith.constant dense<0.000000e+00> : vector<8x32xf32>
      %16 = tpu.matmul %14, %15, %cst_15 {dimension_numbers = #tpu.dot_dimension_numbers<[1], [0], [0], [1], [0, 0, 1, 1], [], []>} : vector<8x64xf32>, vector<64x32xf32>, vector<8x32xf32> -> vector<8x32xf32>
      %c0_16 = arith.constant 0 : index
      %c0_17 = arith.constant 0 : index
      %17 = vector.load %arg5[%c0_16, %c0_17] : memref<8x32xf32, #tpu.memory_space<vmem>>, vector<8x32xf32>
      tpu.vector_store %arg5[%c0_16, %c0_17], %16 {strides = array<i32>} : memref<8x32xf32, #tpu.memory_space<vmem>>, vector<8x32xf32>,
    } else {
    }
    return
  }
  func.func @transform_0(%arg0: i32, %arg1: i32) -> (i32, i32) {
    %c0_i32 = arith.constant 0 : i32
    return %arg0, %arg1 : i32, i32
  }
  func.func @transform_1(%arg0: i32, %arg1: i32) -> (i32, i32) {
    %c0_i32 = arith.constant 0 : i32
    %c0_i32_0 = arith.constant 0 : i32
    return %c0_i32, %arg1 : i32, i32
  }
  func.func @transform_2(%arg0: i32, %arg1: i32) -> (i32, i32) {
    %c0_i32 = arith.constant 0 : i32
    %c0_i32_0 = arith.constant 0 : i32
    %c0_i32_1 = arith.constant 0 : i32
    return %c0_i32, %c0_i32_0 : i32, i32
  }
  func.func @transform_3(%arg0: i32, %arg1: i32) -> (i32, i32) {
    %c0_i32 = arith.constant 0 : i32
    %c0_i32_0 = arith.constant 0 : i32
    return %arg0, %c0_i32 : i32, i32
  }
}

</mosaic_0001>

<llo_original>
// kernel: tpu_custom_call.1
$region0: #{tpu_custom_call.1}
  #allocation0 [shape = 'u32[]', space=smem, size = 0x4, offset = 0x4, fixed_abs, tag = 'smem constant byte address 0x4 - core index']
  #allocation1 [shape = 'u32[72,128]{1,0:T(1,128)}', space=vmem, size = 0x9000, scoped, tag = 'internal scratch']
  #allocation2 [shape = 'f32[8,64]{1,0:T(8,128)}', space=vmem, size = 0x1000, scoped, tag = 'scratch operand']
  %s0 = inlined_call_operand.vmem [shape: f32[16,32], index: 0, kind: input, shape index: {}]
  %s1 = inlined_call_operand.vmem [shape: f32[64,32], index: 1, kind: input, shape index: {}]
  %s2 = inlined_call_operand.vmem [shape: f32[64,32], index: 2, kind: input, shape index: {}]
  %s3 = inlined_call_operand.hbm [shape: f32[16,32], index: 3, kind: output, shape index: {}]
  %s4 = sld [smem:[#allocation0]]
  $region53: #{tpu_custom_call.1} parent=0
    _
  %s6 = ssub.s32 1, %s4
  %s7 = scalar_select 0, %s6, %s4
  $region1: #{tpu_custom_call.1} parent=0
    #allocation3 [shape = 'u8[8192]{0}', space=vmem, size = 0x2000, scoped, tag = 'output window, operand 0']
    #allocation4 [shape = 's32[2]{0}', space=sflag, size = 0x8, scoped, tag = 'scoped memory for tpu_custom_call.1']
    %8 = vsyncpa [#allocation4], 0
    %s9 = scalar_lea.sflag [#allocation4], 1
    %10 = vsyncpa %s9, 0
    loop: start=0, step=1, limit=4
    $region2: #{tpu_custom_call.1} parent=1 // loop_pre_header
      _
    $region3: #{tpu_custom_call.1} parent=1 // loop_header
      %s12 = sphi 0, %s16
      %p13 = scmp.ge.s32.totalorder %s12, 4
      %s19 = sphi 0, %s31
      %s20 = sphi 0, %s27
      %s21 = sphi 0, %s19
      %s22 = sphi 0, %s20
      %s23 = sphi 0, %s21
      %s24 = sphi 0, %s22
      %s36 = sphi 0, %s38
      %s39 = sphi 0, %s36
      %s40 = sphi 0, %s39
      %s56 = sphi 0, %s40
      %s62 = sphi 0, %s64
      %s65 = sphi 0, %s62
      %s66 = sphi 0, %s65
      %s82 = sphi 0, %s66
      %s86 = sphi 0, %s86
      %s88 = sphi 0, %s86
      %s89 = sphi 0, %s88
      %s103 = sphi 0, %s89
      %s109 = sphi 0, %s111
      %s112 = sphi 0, %s109
      %s113 = sphi 0, %s112
      %s129 = sphi 0, %s113
    $region4: #{tpu_custom_call.1} parent=1 // loop_header_branch
      %15 = sbr.rel (%p13) target = $region8
    $region5: #{tpu_custom_call.1} parent=1 // loop_body
      %s17 = ssub.s32 %s12, 1
      %s18 = ssub.s32 %s12, 2
      %s25 = sadd.s32 1, %s20
      %p26 = scmp.ge.s32.totalorder %s25, 1
      %s27 = scalar_select %p26, 0, %s25
      %s28 = sadd.s32 1, %s19
      %s29 = scalar_select %p26, %s28, %s19
      %p30 = scmp.ge.s32.totalorder %s29, 2
      %s31 = scalar_select %p30, 0, %s29
      %s32 = ssub.s32 %s19, %s31
      %s33 = ssub.s32 %s20, %s27
      %s34 = sor.u32 %s32, %s33
      %p35 = scmp.eq.s32.totalorder %s34, 0
      %s37 = sadd.s32 %s36, 1
      %s38 = scalar_select %p35, %s36, %s37
      %p41 = pneg %p35
      %p42 = scmp.eq.s32.totalorder %s12, 1
      %p43 = por %p41, %p42
      %p44 = scmp.ne.s32.totalorder %s36, %s39
      %p45 = scmp.eq.s32.totalorder %s12, 0
      %p46 = por %p44, %p45
      %p47 = scmp.ne.s32.totalorder %s36, %s39
      %p48 = scmp.eq.s32.totalorder %s17, 1
      %p49 = por %p47, %p48
      %p50 = scmp.ne.s32.totalorder %s39, %s40
      %p51 = scmp.eq.s32.totalorder %s17, 0
      %p52 = por %p50, %p51
      %p53 = scmp.ne.s32.totalorder %s39, %s40
      %p54 = scmp.eq.s32.totalorder %s18, 1
      %p55 = por %p53, %p54
      %p57 = scmp.ne.s32.totalorder %s40, %s56
      %p58 = scmp.eq.s32.totalorder %s18, 0
      %p59 = por %p57, %p58
      %s60 = ssub.s32 %s20, %s27
      %p61 = scmp.eq.s32.totalorder %s60, 0
      %s63 = sadd.s32 %s62, 1
      %s64 = scalar_select %p61, %s62, %s63
      %p67 = pneg %p61
      %p68 = scmp.eq.s32.totalorder %s12, 1
      %p69 = por %p67, %p68
      %p70 = scmp.ne.s32.totalorder %s62, %s65
      %p71 = scmp.eq.s32.totalorder %s12, 0
      %p72 = por %p70, %p71
      %p73 = scmp.ne.s32.totalorder %s62, %s65
      %p74 = scmp.eq.s32.totalorder %s17, 1
      %p75 = por %p73, %p74
      %p76 = scmp.ne.s32.totalorder %s65, %s66
      %p77 = scmp.eq.s32.totalorder %s17, 0
      %p78 = por %p76, %p77
      %p79 = scmp.ne.s32.totalorder %s65, %s66
      %p80 = scmp.eq.s32.totalorder %s18, 1
      %p81 = por %p79, %p80
      %p83 = scmp.ne.s32.totalorder %s66, %s82
      %p84 = scmp.eq.s32.totalorder %s18, 0
      %p85 = por %p83, %p84
      %s87 = sadd.s32 %s86, 1
      %p90 = scmp.eq.s32.totalorder %s12, 1
      %p91 = scmp.ne.s32.totalorder %s86, %s88
      %p92 = scmp.eq.s32.totalorder %s12, 0
      %p93 = por %p91, %p92
      %p94 = scmp.ne.s32.totalorder %s86, %s88
      %p95 = scmp.eq.s32.totalorder %s17, 1
      %p96 = por %p94, %p95
      %p97 = scmp.ne.s32.totalorder %s88, %s89
      %p98 = scmp.eq.s32.totalorder %s17, 0
      %p99 = por %p97, %p98
      %p100 = scmp.ne.s32.totalorder %s88, %s89
      %p101 = scmp.eq.s32.totalorder %s18, 1
      %p102 = por %p100, %p101
      %p104 = scmp.ne.s32.totalorder %s89, %s103
      %p105 = scmp.eq.s32.totalorder %s18, 0
      %p106 = por %p104, %p105
      %s107 = ssub.s32 %s19, %s31
      %p108 = scmp.eq.s32.totalorder %s107, 0
      %s110 = sadd.s32 %s109, 1
      %s111 = scalar_select %p108, %s109, %s110
      %p114 = pneg %p108
      %p115 = scmp.eq.s32.totalorder %s12, 1
      %p116 = por %p114, %p115
      %p117 = scmp.ne.s32.totalorder %s109, %s112
      %p118 = scmp.eq.s32.totalorder %s12, 0
      %p119 = por %p117, %p118
      %p120 = scmp.ne.s32.totalorder %s109, %s112
      %p121 = scmp.eq.s32.totalorder %s17, 1
      %p122 = por %p120, %p121
      %p123 = scmp.ne.s32.totalorder %s112, %s113
      %p124 = scmp.eq.s32.totalorder %s17, 0
      %p125 = por %p123, %p124
      %p126 = scmp.ne.s32.totalorder %s112, %s113
      %p127 = scmp.eq.s32.totalorder %s18, 1
      %p128 = por %p126, %p127
      %p130 = scmp.ne.s32.totalorder %s113, %s129
      %p131 = scmp.eq.s32.totalorder %s18, 0
      %p132 = por %p130, %p131
      %p133 = scmp.le.s32.totalorder 1, %s12
      %p134 = scmp.lt.s32.totalorder %s12, 3
      %p135 = pnand %p133, %p134
      %p136 = pneg %p135
      // Predicated region
      $region9: #{tpu_custom_call.1} parent=5 // pred_check
        _
      $region10: #{tpu_custom_call.1} parent=5 // pred_check_branch
        %138 = sbr.rel (%p135) target = $region12
      $region11: #{tpu_custom_call.1} parent=5 // pred_region
        %s139 = ssub.s32 %s12, 1
        // Predicated region
        $region13: #{tpu_custom_call.1} parent=11 // pred_check
          %p140 = pneg %p78
        $region14: #{tpu_custom_call.1} parent=11 // pred_check_branch
          %142 = sbr.rel (%p140) target = $region16
        $region15: #{tpu_custom_call.1} parent=11 // pred_region
          %p143 = scmp.lt.s32.totalorder %s22, 0
          %s144 = scalar_select %p143, %s22, 0
          %s145 = smul.addr %s144, 8
          %s146 = scalar_lea.vmem %s1, %s145
        $region16: #{tpu_custom_call.1} parent=11 // pred_fallthru
          _
        // Predicated region
        $region17: #{tpu_custom_call.1} parent=11 // pred_check
          %p147 = pneg %p99
        $region18: #{tpu_custom_call.1} parent=11 // pred_check_branch
          %149 = sbr.rel (%p147) target = $region20
        $region19: #{tpu_custom_call.1} parent=11 // pred_region
          _
        $region20: #{tpu_custom_call.1} parent=11 // pred_fallthru
          _
      $region12: #{tpu_custom_call.1} parent=5 // pred_fallthru
        _
      %p150 = scmp.lt.s32.totalorder %s12, 2
      // Predicated region
      $region21: #{tpu_custom_call.1} parent=5 // pred_check
        %p151 = pneg %p150
      $region22: #{tpu_custom_call.1} parent=5 // pred_check_branch
        %153 = sbr.rel (%p151) target = $region24
      $region23: #{tpu_custom_call.1} parent=5 // pred_region
        // Predicated region
        $region25: #{tpu_custom_call.1} parent=23 // pred_check
          %p154 = pneg %p46
        $region26: #{tpu_custom_call.1} parent=23 // pred_check_branch
          %156 = sbr.rel (%p154) target = $region28
        $region27: #{tpu_custom_call.1} parent=23 // pred_region
          %p157 = scmp.lt.s32.totalorder %s19, 1
          %s158 = scalar_select %p157, %s19, 1
          %p159 = scmp.lt.s32.totalorder %s20, 0
          %s160 = scalar_select %p159, %s20, 0
          %s161 = sadd.s32 %s160, %s158
          %s162 = smul.addr %s161, 8
          %s163 = scalar_lea.vmem %s0, %s162
        $region28: #{tpu_custom_call.1} parent=23 // pred_fallthru
          _
      $region24: #{tpu_custom_call.1} parent=5 // pred_fallthru
        _
      %p164 = scmp.le.s32.totalorder 1, %s12
      %p165 = scmp.lt.s32.totalorder %s12, 3
      %p166 = pnand %p164, %p165
      %p167 = pneg %p166
      // Predicated region
      $region29: #{tpu_custom_call.1} parent=5 // pred_check
        _
      $region30: #{tpu_custom_call.1} parent=5 // pred_check_branch
        %169 = sbr.rel (%p166) target = $region32
      $region31: #{tpu_custom_call.1} parent=5 // pred_region
        %s170 = ssub.s32 %s12, 1
        %p171 = scmp.lt.s32.totalorder %s21, 1
        %s172 = scalar_select %p171, %s21, 1
        %p173 = scmp.lt.s32.totalorder %s22, 0
        %s174 = scalar_select %p173, %s22, 0
        %s175 = sadd.s32 %s174, %s172
        %s176 = smul.addr %s175, 8
        %s177 = scalar_lea.vmem %s0, %s176
        %p178 = pneg %p52
        %p179 = pneg %p49
        %p180 = scmp.lt.s32.totalorder %s22, 0
        %s181 = scalar_select %p180, %s22, 0
        %s182 = smul.addr %s181, 8
        %s183 = scalar_lea.vmem %s1, %s182
        %p184 = pneg %p78
        %p185 = pneg %p75
        %p186 = pneg %p99
        %p187 = pneg %p96
        %p188 = pneg %p125
        %p189 = pneg %p122
        %s190 = sand.u32 %s112, 1
        %s191 = scalar_lea.sflag [#allocation4], %s190
        %s192 = sand.u32 %s112, 1
        %s193 = smul.addr %s192, 8
        %s194 = scalar_lea.vmem [#allocation3], %s193
        %p195 = scmp.lt.s32.totalorder %s21, 1
        %s196 = scalar_select %p195, %s21, 1
        %p197 = scmp.lt.s32.totalorder %s22, 0
        %s198 = scalar_select %p197, %s22, 0
        %s199 = sadd.s32 %s198, %s196
        %s200 = smul.addr %s199, 8
        %s201 = scalar_lea.vmem %s0, %s200
        %p202 = scmp.lt.s32.totalorder %s22, 0
        %s203 = scalar_select %p202, %s22, 0
        %s204 = smul.addr %s203, 8
        %s205 = scalar_lea.vmem %s1, %s204
        %p206 = scmp.eq.s32.totalorder %s22, 0
        // Predicated region
        $region33: #{tpu_custom_call.1} parent=31 // pred_check
          %p207 = pneg %p206
        $region34: #{tpu_custom_call.1} parent=31 // pred_check_branch
          %209 = sbr.rel (%p207) target = $region36
        $region35: #{tpu_custom_call.1} parent=31 // pred_region
          %vm210 = vcmask 523264
          %211 = vst.msk [vmem:[#allocation2] sm:$0xff] %vm210, 0.0
        $region36: #{tpu_custom_call.1} parent=31 // pred_fallthru
          _
        %v212 = vld [vmem:[#allocation2] sm:$0xff]
        %v213 = vld [vmem:[%s201] sm:$0xff]
        %v214 = vld [vmem:[%s205] sm:$0xff]
        %v215 = vld [vmem:[%s205 + $0x8] sm:$0xff]
        %v216 = vld [vmem:[%s205 + $0x10] sm:$0xff]
        %v217 = vld [vmem:[%s205 + $0x18] sm:$0xff]
        %v218 = vld [vmem:[%s205 + $0x20] sm:$0xff]
        %v219 = vld [vmem:[%s205 + $0x28] sm:$0xff]
        %v220 = vld [vmem:[%s205 + $0x30] sm:$0xff]
        %v221 = vld [vmem:[%s205 + $0x38] sm:$0xff]
        %vm222 = vcmask 261120
        %v224 = vsel %vm222, %v213, 0
        %v227 = vsel %vm222, %v214, 0
        %v230 = vsel %vm222, %v215, 0
        %v233 = vsel %vm222, %v216, 0
        %v236 = vsel %vm222, %v217, 0
        %v239 = vsel %vm222, %v218, 0
        %v242 = vsel %vm222, %v219, 0
        %v245 = vsel %vm222, %v220, 0
        %v248 = vsel %vm222, %v221, 0
        %250 = vmatpush.xpose.msra.mxu0 0.0
        %251 = vmatpush.xpose.msra.mxu0 0.0
        %252 = vmatpush.xpose.msra.mxu0 0.0
        %253 = vmatpush.xpose.msra.mxu0 0.0
        %254 = vmatpush.xpose.msra.mxu0 0.0
        %255 = vmatpush.xpose.msra.mxu0 0.0
        %256 = vmatpush.xpose.msra.mxu0 0.0
        %257 = vmatpush.xpose.msra.mxu0 0.0
        %258 = vmatpush.xpose.msra.mxu0 %v248
        %259 = vmatpush.xpose.msra.mxu0 %v245
        %260 = vmatpush.xpose.msra.mxu0 %v242
        %261 = vmatpush.xpose.msra.mxu0 %v239
        %262 = vmatpush.xpose.msra.mxu0 %v236
        %263 = vmatpush.xpose.msra.mxu0 %v233
        %264 = vmatpush.xpose.msra.mxu0 %v230
        %265 = vmatpush.xpose.msra.mxu0 %v227
        %266 = vmatmul.f32.gmra.mxu0 %v224
        %v267 = vpop.f32.mrf.mxu0
        %v268 = vadd.f32 0.0, %v267
        %269 = vdwg.mxu0
        %v270 = vadd.f32 %v212, %v268
        %vm271 = vcmask 523264
        %272 = vst.msk [vmem:[#allocation2] sm:$0xff] %vm271, %v270
        // Predicated region
        $region37: #{tpu_custom_call.1} parent=31 // pred_check
          %p273 = pneg %p206
        $region38: #{tpu_custom_call.1} parent=31 // pred_check_branch
          %275 = sbr.rel (%p273) target = $region40
        $region39: #{tpu_custom_call.1} parent=31 // pred_region
          %v276 = vld [vmem:[#allocation2] sm:$0xff]
          %v277 = vmul.f32 %v276, 2.0
          %v278 = vld [vmem:[%s2] sm:$0xff]
          %v279 = vld [vmem:[%s2 + $0x8] sm:$0xff]
          %v280 = vld [vmem:[%s2 + $0x10] sm:$0xff]
          %v281 = vld [vmem:[%s2 + $0x18] sm:$0xff]
          %v282 = vld [vmem:[%s2 + $0x20] sm:$0xff]
          %v283 = vld [vmem:[%s2 + $0x28] sm:$0xff]
          %v284 = vld [vmem:[%s2 + $0x30] sm:$0xff]
          %v285 = vld [vmem:[%s2 + $0x38] sm:$0xff]
          %v287 = vsel %vm271, %v277, 0
          %289 = vmatpush.msra.mxu0 0.0
          %290 = vmatpush.msra.mxu0 0.0
          %291 = vmatpush.msra.mxu0 0.0
          %292 = vmatpush.msra.mxu0 0.0
          %293 = vmatpush.msra.mxu0 0.0
          %294 = vmatpush.msra.mxu0 0.0
          %295 = vmatpush.msra.mxu0 0.0
          %296 = vmatpush.msra.mxu0 0.0
          %297 = vmatpush.msra.mxu0 %v285
          %298 = vmatpush.msra.mxu0 %v284
          %299 = vmatpush.msra.mxu0 %v283
          %300 = vmatpush.msra.mxu0 %v282
          %301 = vmatpush.msra.mxu0 %v281
          %302 = vmatpush.msra.mxu0 %v280
          %303 = vmatpush.msra.mxu0 %v279
          %304 = vmatpush.msra.mxu0 %v278
          %305 = vmatmul.f32.gmra.mxu0 %v287
          %v306 = vpop.f32.mrf.mxu0
          %v307 = vadd.f32 0.0, %v306
          %308 = vdwg.mxu0
          %309 = vst.msk [vmem:[%s194] sm:$0xff] %vm222, %v307
        $region40: #{tpu_custom_call.1} parent=31 // pred_fallthru
          _
        %s310 = sand.u32 %s112, 1
        %s311 = scalar_lea.sflag [#allocation4], %s310
        %s312 = sand.u32 %s112, 1
        %s313 = smul.addr %s312, 8
        %s314 = scalar_lea.vmem [#allocation3], %s313
        // Predicated region
        $region41: #{tpu_custom_call.1} parent=31 // pred_check
          %p315 = pneg %p122
        $region42: #{tpu_custom_call.1} parent=31 // pred_check_branch
          %317 = sbr.rel (%p315) target = $region44
        $region43: #{tpu_custom_call.1} parent=31 // pred_region
          %319 = vsyncadd %s311, 0
          %s320 = smul.addr %s21, 8
          %s321 = scalar_lea.hbm %s3, %s320
          %s323 = sshll.u32 %s314, 4
          %s324 = int_to_ptr.vmem [resolvable:$true] %s323
          %s325 = sshll.u32 %s321, 4
          %s326 = int_to_ptr.hbm [resolvable:$true] %s325
          %328 = dma.vmem_to_hbm [thread:$0]  %s324, 128, %s326, %s311
        $region44: #{tpu_custom_call.1} parent=31 // pred_fallthru
          _
      $region32: #{tpu_custom_call.1} parent=5 // pred_fallthru
        _
      %p329 = scmp.le.s32.totalorder 2, %s12
      // Predicated region
      $region45: #{tpu_custom_call.1} parent=5 // pred_check
        %p330 = pneg %p329
      $region46: #{tpu_custom_call.1} parent=5 // pred_check_branch
        %332 = sbr.rel (%p330) target = $region48
      $region47: #{tpu_custom_call.1} parent=5 // pred_region
        %s333 = ssub.s32 %s12, 2
        // Predicated region
        $region49: #{tpu_custom_call.1} parent=47 // pred_check
          %p334 = pneg %p128
        $region50: #{tpu_custom_call.1} parent=47 // pred_check_branch
          %336 = sbr.rel (%p334) target = $region52
        $region51: #{tpu_custom_call.1} parent=47 // pred_region
          %s337 = sand.u32 %s113, 1
          %s338 = scalar_lea.sflag [#allocation4], %s337
          %s339 = sand.u32 %s113, 1
          %s340 = smul.addr %s339, 8
          %s341 = scalar_lea.vmem [#allocation3], %s340
          %343 = dma.done %s338, 128
        $region52: #{tpu_custom_call.1} parent=47 // pred_fallthru
          _
      $region48: #{tpu_custom_call.1} parent=5 // pred_fallthru
        _
    $region6: #{tpu_custom_call.1} parent=1 // loop_footer
      %s16 = sadd.s32 1, %s12
    $region7: #{tpu_custom_call.1} parent=1 // loop_footer_branch
      %11 = sbr.rel target = $region3
    $region8: #{tpu_custom_call.1} parent=1 // loop_exit
      _
    %344 = vsyncpa [#allocation4], 1
    %s345 = scalar_lea.sflag [#allocation4], 1
    %346 = vsyncpa %s345, 1

</llo_original>
